<compile_context>
chip_gen: v7x
topology: tpu7x:2x2x1
jax: 0.10.0
libtpu: 0.0.40
codegen_flags: <defaults>
</compile_context>

<pallas_src>
import functools
import math

import jax
import jax.numpy as jnp
from jax.experimental import pallas as pl
from jax.experimental.pallas import tpu as pltpu

_LANE = 128


def _round_up(v, m):
    return ((v + m - 1) // m) * m


def _patch_embed_kernel(x_ref, w_ref, b_ref, o_ref):
    # x_ref: (tm, Kp) bf16   streamed / pipelined flattened-patch rows
    # w_ref: (Kp, Np) bf16   projection weight (VMEM-resident across the grid)
    # b_ref: (1,  Np) f32    bias               (VMEM-resident)
    # o_ref: (tm, Np)        output tokens (lane-dense grouped view)
    acc = jnp.dot(x_ref[...], w_ref[...], preferred_element_type=jnp.float32)
    o_ref[...] = (acc + b_ref[...]).astype(o_ref.dtype)


def patch_embed_forward(x, weight, bias, patch_size, *,
                        compute_dtype=jnp.bfloat16,
                        out_dtype=None,
                        block_m=8192,
                        vmem_budget_bytes=24 * 1024 * 1024):
    """Swin-V2 PatchEmbed forward (norm_layer=None).

    x:      (B, C, H, W)   NCHW activations.
    weight: (E, C, ph, pw) Conv2d weight.
    bias:   (E,)           Conv2d bias.
    Returns (B, num_patches, E).

    NOTE: the matmul runs in `compute_dtype` (bf16 by default) and the result
    is written in `out_dtype` (defaults to `compute_dtype`).  This
    intentionally diverges from PyTorch's f32 Conv2d by ~1e-2 relative;
    pass compute_dtype=out_dtype=jnp.float32 for full precision.
    """
    B, C, H, W = x.shape
    ph, pw = patch_size
    E = weight.shape[0]
    assert H % ph == 0 and W % pw == 0, "image size must be divisible by patch size"
    Hp, Wp = H // ph, W // pw
    num_patches = Hp * Wp
    out_dtype = compute_dtype if out_dtype is None else out_dtype

    # ---- patch-extraction glue (XLA convert + transpose pass) ---------------
    # This materializes a bf16 (M, K) copy in HBM: read f32 + write bf16 here,
    # plus the kernel's bf16 re-read.  The kernel itself never re-touches HBM
    # for the rearranged data.
    # TODO(synk): pull the im2col into the kernel (in-VMEM (C,ph,pw)->lane
    # repack) or take NHWC activations upstream to remove this extra HBM pass.
    xc = x.astype(compute_dtype)
    xp = xc.reshape(B, C, Hp, ph, Wp, pw)
    xp = jnp.transpose(xp, (0, 2, 4, 1, 3, 5))           # (B, Hp, Wp, C, ph, pw)
    xp = xp.reshape(B * num_patches, C * ph * pw)        # (M, K), row-major

    K = C * ph * pw
    M = B * num_patches

    w2d = weight.reshape(E, K).T.astype(compute_dtype)   # (K, E)
    b1d = bias.astype(jnp.float32)                       # bias add stays f32

    # ---- lane-dense row grouping (no in-kernel relayout needed) -------------
    # Group r consecutive tokens per kernel row so the output lane width r*E is
    # a multiple of 128.  The grouped LHS/output views are reshapes of the same
    # contiguous HBM bytes (free); only the tiny weight becomes block-diagonal.
    r = 1
    if E < _LANE:
        r_full = _LANE // math.gcd(E, _LANE)
        if r_full <= 8 and M % r_full == 0:
            r = r_full
    Kp, Np, Mp = r * K, r * E, M // r

    if r > 1:
        xp = xp.reshape(Mp, Kp)                                  # free reshape
        w_mat = jnp.kron(jnp.eye(r, dtype=compute_dtype), w2d)   # (Kp, Np) block-diag
        b_mat = jnp.tile(b1d, r).reshape(1, Np)
    else:
        w_mat = w2d
        b_mat = b1d.reshape(1, Np)

    # ---- tile sizing: lane-padding-aware VMEM budget -------------------------
    in_isz = jnp.dtype(compute_dtype).itemsize
    out_isz = jnp.dtype(out_dtype).itemsize
    lane_k = _round_up(Kp, _LANE)
    lane_n = _round_up(Np, _LANE)
    # double-buffered streamed x block + double-buffered out block, per row
    per_row = 2 * lane_k * in_isz + 2 * lane_n * out_isz
    resident = _round_up(Kp, 8) * lane_n * in_isz + lane_n * 4   # weight + bias
    max_rows = max(8, ((vmem_budget_bytes - resident) // per_row) // 8 * 8)

    if Mp < 8:
        tm = Mp                                    # full-extent (sub-sublane) block
    else:
        tm = max(1, block_m // r)                  # target ~block_m tokens per step
        tm = min(tm, max_rows)                     # VMEM budget (padded, double-buffered)
        # keep >= 2 grid steps so v7x's second TensorCore has work
        tm = min(tm, _round_up(pl.cdiv(Mp, 2), 8))
        tm = max(8, (tm // 8) * 8)

    grid = (pl.cdiv(Mp, tm),)   # partial last block handled by Pallas

    out = pl.pallas_call(
        _patch_embed_kernel,
        out_shape=jax.ShapeDtypeStruct((Mp, Np), out_dtype),
        grid=grid,
        in_specs=[
            pl.BlockSpec((tm, Kp), lambda i: (i, 0)),    # streamed patch rows
            pl.BlockSpec((Kp, Np), lambda i: (0, 0)),    # resident weight
            pl.BlockSpec((1, Np), lambda i: (0, 0)),     # resident bias
        ],
        out_specs=pl.BlockSpec((tm, Np), lambda i: (i, 0)),
        compiler_params=pltpu.CompilerParams(
            dimension_semantics=("parallel",),           # shard M over v7x's 2 TCs
            # 48 MiB: above every generation's scoped default, below v7x's
            # 64 MiB physical per-TC VMEM (v5e/v6e have 128 MiB physical).
            vmem_limit_bytes=48 * 1024 * 1024,
        ),
    )(xp, w_mat, b_mat)

    # (Mp, r*E) and (M, E) are the same contiguous bytes -> free reshape.
    return out.reshape(B, num_patches, E)


if __name__ == "__main__":
    # Small shapes consistent with the module: img_size=16, patch_size=4,
    # in_chans=4, embed_dim=32, batch=2 -> num_patches = (16/4)^2 = 16.
    B, C, H, W = 2, 4, 16, 16
    patch_size = (4, 4)
    embed_dim = 32

    key = jax.random.PRNGKey(0)
    kx, kw, kb = jax.random.split(key, 3)
    x = jax.random.normal(kx, (B, C, H, W), dtype=jnp.float32)
    # synthetic conv parameters (shapes from nn.Conv2d in __init__)
    weight = jax.random.normal(kw, (embed_dim, C, patch_size[0], patch_size[1]),
                               dtype=jnp.float32) * 0.02
    bias = jax.random.normal(kb, (embed_dim,), dtype=jnp.float32) * 0.02

    fwd = jax.jit(functools.partial(patch_embed_forward, patch_size=patch_size))
    out = jax.block_until_ready(fwd(x, weight, bias))

    # pure-JAX conv reference (same semantics as nn.Conv2d + flatten + transpose)
    ref = jax.lax.conv_general_dilated(
        x, weight, window_strides=patch_size, padding="VALID",
        dimension_numbers=("NCHW", "OIHW", "NCHW"))
    ref = ref.reshape(B, embed_dim, -1).transpose(0, 2, 1) + bias.reshape(1, 1, -1)

    num_patches = (H // patch_size[0]) * (W // patch_size[1])
    assert out.shape == (B, num_patches, embed_dim), out.shape
    # bf16 matmul inputs + bf16 output -> looser tolerance vs f32 reference
    err = float(jnp.max(jnp.abs(out.astype(jnp.float32) - ref)))
    assert err < 3e-2, f"max abs err {err}"
    print("KERNEL_OK")
</pallas_src>

<mosaic_0001>
module attributes {stable_mosaic.version = 11 : i64} {
  func.func @_patch_embed_kernel(%arg0: i32, %arg1: memref<8x256xbf16, #tpu.memory_space<vmem>>, %arg2: memref<256x128xbf16, #tpu.memory_space<vmem>>, %arg3: memref<1x128xf32, #tpu.memory_space<vmem>>, %arg4: memref<8x128xbf16, #tpu.memory_space<vmem>>) attributes {dimension_semantics = [#tpu.dimension_semantics<parallel>], iteration_bounds = array<i64: 1>, scalar_prefetch = 0 : i64, scratch_operands = 0 : i64, tpu.core_type = #tpu.core_type<tc>, window_params = [{transform_indices = @transform_0, window_bounds = array<i64: 8, 256>}, {pipeline_mode = #tpu.pipeline_mode<synchronous>, transform_indices = @transform_1, window_bounds = array<i64: 256, 128>}, {pipeline_mode = #tpu.pipeline_mode<synchronous>, transform_indices = @transform_2, window_bounds = array<i64: 1, 128>}, {transform_indices = @transform_3, window_bounds = array<i64: 8, 128>}]} {
    %c0 = arith.constant 0 : index
    %c0_0 = arith.constant 0 : index
    %0 = vector.load %arg1[%c0, %c0_0] : memref<8x256xbf16, #tpu.memory_space<vmem>>, vector<8x256xbf16>
    %c0_1 = arith.constant 0 : index
    %c0_2 = arith.constant 0 : index
    %1 = vector.load %arg2[%c0_1, %c0_2] : memref<256x128xbf16, #tpu.memory_space<vmem>>, vector<256x128xbf16>
    %cst = arith.constant dense<0.000000e+00> : vector<8x128xf32>
    %2 = tpu.matmul %0, %1, %cst {dimension_numbers = #tpu.dot_dimension_numbers<[1], [0], [0], [1], [0, 0, 1, 1], [], []>} : vector<8x256xbf16>, vector<256x128xbf16>, vector<8x128xf32> -> vector<8x128xf32>
    %c0_3 = arith.constant 0 : index
    %c0_4 = arith.constant 0 : index
    %3 = vector.load %arg3[%c0_3, %c0_4] : memref<1x128xf32, #tpu.memory_space<vmem>>, vector<1x128xf32>
    %4 = vector.broadcast %3 : vector<1x128xf32> to vector<8x128xf32>
    %5 = arith.addf %2, %4 : vector<8x128xf32>
    %6 = arith.truncf %5 : vector<8x128xf32> to vector<8x128xbf16>
    %c0_5 = arith.constant 0 : index
    %c0_6 = arith.constant 0 : index
    %7 = vector.load %arg4[%c0_5, %c0_6] : memref<8x128xbf16, #tpu.memory_space<vmem>>, vector<8x128xbf16>
    tpu.vector_store %arg4[%c0_5, %c0_6], %6 {strides = array<i32>} : memref<8x128xbf16, #tpu.memory_space<vmem>>, vector<8x128xbf16>,
    return
  }
  func.func @transform_0(%arg0: i32) -> (i32, i32) {
    %c0_i32 = arith.constant 0 : i32
    %c0_i32_0 = arith.constant 0 : i32
    return %arg0, %c0_i32 : i32, i32
  }
  func.func @transform_1(%arg0: i32) -> (i32, i32) {
    %c0_i32 = arith.constant 0 : i32
    %c0_i32_0 = arith.constant 0 : i32
    %c0_i32_1 = arith.constant 0 : i32
    return %c0_i32, %c0_i32_0 : i32, i32
  }
  func.func @transform_2(%arg0: i32) -> (i32, i32) {
    %c0_i32 = arith.constant 0 : i32
    %c0_i32_0 = arith.constant 0 : i32
    %c0_i32_1 = arith.constant 0 : i32
    return %c0_i32, %c0_i32_0 : i32, i32
  }
  func.func @transform_3(%arg0: i32) -> (i32, i32) {
    %c0_i32 = arith.constant 0 : i32
    %c0_i32_0 = arith.constant 0 : i32
    return %arg0, %c0_i32 : i32, i32
  }
}

</mosaic_0001>

<llo_original>
// kernel: tile.8
$region0: #{tile.8}
  #allocation0 [shape = 's32[1]{0}', space=sflag, size = 0x4, scoped, tag = 'scoped memory for tile.8']
  %s0 = inlined_call_operand.vmem [shape: f32[32], index: 0, kind: input, shape index: {}]
  %s1 = inlined_call_operand.vmem [shape: f32[4,32], index: 1, kind: output, shape index: {}]
  // Predicated region
  $region2: #{tile.8} parent=0 // pred_check
    _
  $region3: #{tile.8} parent=0 // pred_check_branch
    %3 = sbr.rel (0) target = $region5
  $region4: #{tile.8} parent=0 // pred_region
    _
  $region5: #{tile.8} parent=0 // pred_fallthru
    _
  %v4 = vld [vmem:[%s0] ss:$0 sm:$0xff]
  %5 = vst [vmem:[%s1] sm:$0xf] %v4

// kernel: tile.9
$region0: #{tile.9}
  %s0 = inlined_call_operand.vmem [shape: f32[4,32], index: 0, kind: input, shape index: {}]
  %s1 = inlined_call_operand.vmem [shape: f32[1,128], index: 1, kind: output, shape index: {}]
  $region1: #{tile.9} parent=0
    #allocation0 [shape = 'u8[4096]{0}', space=vmem, size = 0x1000, scoped, tag = 'scoped mem for output reshape']
    #allocation1 [shape = 'u8[4096]{0}', space=vmem, size = 0x1000, scoped, tag = 'scoped mem for input reshape']
    %s3 = sshllo.u32 0, 4
    %v4 = vld [vmem:[%s0] sm:%s3]
    %5 = vst [vmem:[#allocation1] sm:%s3] %v4
    %v6 = vld [vmem:[#allocation1] sm:$0x1]
    %vm7 = vcmask 261120
    %8 = vst.msk [vmem:[#allocation0] sm:$0x1] %vm7, %v6
    %s9 = scalar_lea.vmem [#allocation1], 3
    %v10 = vld [vmem:[%s9] sm:$0x1]
    %11 = vrot.lane.b32.xlu0 %v10, 96
    %v12 = vpop.permute.xlu0 %11
    %vm13 = vcmask 1048320
    %14 = vst.msk [vmem:[#allocation0] sm:$0x1] %vm13, %v12
    %s15 = scalar_lea.vmem [#allocation1], 2
    %v16 = vld [vmem:[%s15] sm:$0x1]
    %17 = vrot.lane.b32.xlu0 %v16, 64
    %v18 = vpop.permute.xlu0 %17
    %vm19 = vcmask 785920
    %20 = vst.msk [vmem:[#allocation0] sm:$0x1] %vm19, %v18
    %s21 = scalar_lea.vmem [#allocation1], 1
    %v22 = vld [vmem:[%s21] sm:$0x1]
    %23 = vrot.lane.b32.xlu0 %v22, 32
    %v24 = vpop.permute.xlu0 %23
    %vm25 = vcmask 523520
    %26 = vst.msk [vmem:[#allocation0] sm:$0x1] %vm25, %v24
    %s28 = sshllo.u32 0, 1
    %v30 = vld [vmem:[#allocation0] sm:%s28]
    %s31 = sshllo.u32 0, 1
    %32 = vst [vmem:[%s1] sm:%s31] %v30

// kernel: patch_embed_forward.1
$region0: #{patch_embed_forward.1}
  #allocation0 [shape = 'u32[]', space=smem, size = 0x4, offset = 0x4, fixed_abs, tag = 'smem constant byte address 0x4 - core index']
  #allocation1 [shape = 'u32[144,128]{1,0:T(1,128)}', space=vmem, size = 0x12000, scoped, tag = 'internal scratch']
  %s0 = inlined_call_operand.vmem [shape: bf16[8,256], index: 0, kind: input, shape index: {}]
  %s1 = inlined_call_operand.vmem [shape: bf16[256,128], index: 1, kind: input, shape index: {}]
  %s2 = inlined_call_operand.vmem [shape: f32[1,128], index: 2, kind: input, shape index: {}]
  %s3 = inlined_call_operand.vmem [shape: bf16[8,128], index: 3, kind: output, shape index: {}]
  %s4 = sld [smem:[#allocation0]]
  $region22: #{patch_embed_forward.1} parent=0
    _
  %s6 = ssub.s32 1, %s4
  %s7 = scalar_select 0, %s6, %s4
  // Predicated region
  $region2: #{patch_embed_forward.1} parent=0 // pred_check
    _
  $region3: #{patch_embed_forward.1} parent=0 // pred_check_branch
    %9 = sbr.rel (0) target = $region5
  $region4: #{patch_embed_forward.1} parent=0 // pred_region
    _
  $region5: #{patch_embed_forward.1} parent=0 // pred_fallthru
    _
  // Predicated region
  $region6: #{patch_embed_forward.1} parent=0 // pred_check
    _
  $region7: #{patch_embed_forward.1} parent=0 // pred_check_branch
    %11 = sbr.rel (0) target = $region9
  $region8: #{patch_embed_forward.1} parent=0 // pred_region
    _
  $region9: #{patch_embed_forward.1} parent=0 // pred_fallthru
    _
  // Predicated region
  $region10: #{patch_embed_forward.1} parent=0 // pred_check
    _
  $region11: #{patch_embed_forward.1} parent=0 // pred_check_branch
    %13 = sbr.rel (0) target = $region13
  $region12: #{patch_embed_forward.1} parent=0 // pred_region
    _
  $region13: #{patch_embed_forward.1} parent=0 // pred_fallthru
    _
  %v15 = vld [vmem:[%s0] sm:$0xff]
  %v16 = vld [vmem:[%s1] sm:$0xf]
  %v17 = vld [vmem:[%s1 + $0x4] sm:$0xf]
  %v18 = vld [vmem:[%s1 + $0x8] sm:$0xf]
  %v19 = vld [vmem:[%s1 + $0xc] sm:$0xf]
  %v20 = vld [vmem:[%s1 + $0x10] sm:$0xf]
  %v21 = vld [vmem:[%s1 + $0x14] sm:$0xf]
  %v22 = vld [vmem:[%s1 + $0x18] sm:$0xf]
  %v23 = vld [vmem:[%s1 + $0x1c] sm:$0xf]
  %v24 = vld [vmem:[%s1 + $0x20] sm:$0xf]
  %v25 = vld [vmem:[%s1 + $0x24] sm:$0xf]
  %v26 = vld [vmem:[%s1 + $0x28] sm:$0xf]
  %v27 = vld [vmem:[%s1 + $0x2c] sm:$0xf]
  %v28 = vld [vmem:[%s1 + $0x30] sm:$0xf]
  %v29 = vld [vmem:[%s1 + $0x34] sm:$0xf]
  %v30 = vld [vmem:[%s1 + $0x38] sm:$0xf]
  %v31 = vld [vmem:[%s1 + $0x3c] sm:$0xf]
  %v32 = vld [vmem:[%s1 + $0x40] sm:$0xf]
  %v33 = vld [vmem:[%s1 + $0x44] sm:$0xf]
  %v34 = vld [vmem:[%s1 + $0x48] sm:$0xf]
  %v35 = vld [vmem:[%s1 + $0x4c] sm:$0xf]
  %v36 = vld [vmem:[%s1 + $0x50] sm:$0xf]
  %v37 = vld [vmem:[%s1 + $0x54] sm:$0xf]
  %v38 = vld [vmem:[%s1 + $0x58] sm:$0xf]
  %v39 = vld [vmem:[%s1 + $0x5c] sm:$0xf]
  %v40 = vld [vmem:[%s1 + $0x60] sm:$0xf]
  %v41 = vld [vmem:[%s1 + $0x64] sm:$0xf]
  %v42 = vld [vmem:[%s1 + $0x68] sm:$0xf]
  %v43 = vld [vmem:[%s1 + $0x6c] sm:$0xf]
  %v44 = vld [vmem:[%s1 + $0x70] sm:$0xf]
  %v45 = vld [vmem:[%s1 + $0x74] sm:$0xf]
  %v46 = vld [vmem:[%s1 + $0x78] sm:$0xf]
  %v47 = vld [vmem:[%s1 + $0x7c] sm:$0xf]
  %v48 = vld [vmem:[%s2] sm:$0x1]
  %v50 = vlaneseq
  %v51 = vshrl.u32 %v50, 7
  %v52 = vsub.s32 0, %v51
  %v53 = vrot.slane %v48, %v52
  %v56 = vunpack.c.l.b16 %v15
  %v57 = vunpack.c.h.b16 %v15
  %v58 = vpack.c.b16 %v56, %v56
  %v59 = vpack.c.b16 %v57, %v57
  %v94 = vunpack.c.l.b16 %v16
  %v95 = vunpack.c.l.b16 %v17
  %v96 = vunpack.c.l.b16 %v18
  %v97 = vunpack.c.l.b16 %v19
  %v98 = vunpack.c.l.b16 %v20
  %v99 = vunpack.c.l.b16 %v21
  %v100 = vunpack.c.l.b16 %v22
  %v101 = vunpack.c.l.b16 %v23
  %v102 = vunpack.c.l.b16 %v24
  %v103 = vunpack.c.l.b16 %v25
  %v104 = vunpack.c.l.b16 %v26
  %v105 = vunpack.c.l.b16 %v27
  %v106 = vunpack.c.l.b16 %v28
  %v107 = vunpack.c.l.b16 %v29
  %v108 = vunpack.c.l.b16 %v30
  %v109 = vunpack.c.l.b16 %v31
  %v110 = vunpack.c.l.b16 %v32
  %v111 = vunpack.c.l.b16 %v33
  %v112 = vunpack.c.l.b16 %v34
  %v113 = vunpack.c.l.b16 %v35
  %v114 = vunpack.c.l.b16 %v36
  %v115 = vunpack.c.l.b16 %v37
  %v116 = vunpack.c.l.b16 %v38
  %v117 = vunpack.c.l.b16 %v39
  %v118 = vunpack.c.l.b16 %v40
  %v119 = vunpack.c.l.b16 %v41
  %v120 = vunpack.c.l.b16 %v42
  %v121 = vunpack.c.l.b16 %v43
  %v122 = vunpack.c.l.b16 %v44
  %v123 = vunpack.c.l.b16 %v45
  %v124 = vunpack.c.l.b16 %v46
  %v125 = vunpack.c.l.b16 %v47
  %v126 = vpack.c.b16 %v95, %v94
  %v127 = vpack.c.b16 %v97, %v96
  %v128 = vpack.c.b16 %v99, %v98
  %v129 = vpack.c.b16 %v101, %v100
  %v130 = vpack.c.b16 %v103, %v102
  %v131 = vpack.c.b16 %v105, %v104
  %v132 = vpack.c.b16 %v107, %v106
  %v133 = vpack.c.b16 %v109, %v108
  %v134 = vpack.c.b16 %v111, %v110
  %v135 = vpack.c.b16 %v113, %v112
  %v136 = vpack.c.b16 %v115, %v114
  %v137 = vpack.c.b16 %v117, %v116
  %v138 = vpack.c.b16 %v119, %v118
  %v139 = vpack.c.b16 %v121, %v120
  %v140 = vpack.c.b16 %v123, %v122
  %v141 = vpack.c.b16 %v125, %v124
  %158 = vmatprep.subr.bf16.mxu0 0
  %159 = vmatpush1.bf16.msra.mxu0 %v126
  %160 = vmatprep.subr.bf16.mxu0 0
  %161 = vmatpush1.bf16.msra.mxu0 %v127
  %162 = vmatprep.subr.bf16.mxu0 0
  %163 = vmatpush1.bf16.msra.mxu0 %v128
  %164 = vmatprep.subr.bf16.mxu0 0
  %165 = vmatpush1.bf16.msra.mxu0 %v129
  %166 = vmatprep.subr.bf16.mxu0 0
  %167 = vmatpush1.bf16.msra.mxu0 %v130
  %168 = vmatprep.subr.bf16.mxu0 0
  %169 = vmatpush1.bf16.msra.mxu0 %v131
  %170 = vmatprep.subr.bf16.mxu0 0
  %171 = vmatpush1.bf16.msra.mxu0 %v132
  %172 = vmatprep.subr.bf16.mxu0 0
  %173 = vmatpush1.bf16.msra.mxu0 %v133
  %174 = vmatprep.subr.bf16.mxu0 0
  %175 = vmatpush1.bf16.msra.mxu0 %v134
  %176 = vmatprep.subr.bf16.mxu0 0
  %177 = vmatpush1.bf16.msra.mxu0 %v135
  %178 = vmatprep.subr.bf16.mxu0 0
  %179 = vmatpush1.bf16.msra.mxu0 %v136
  %180 = vmatprep.subr.bf16.mxu0 0
  %181 = vmatpush1.bf16.msra.mxu0 %v137
  %182 = vmatprep.subr.bf16.mxu0 0
  %183 = vmatpush1.bf16.msra.mxu0 %v138
  %184 = vmatprep.subr.bf16.mxu0 0
  %185 = vmatpush1.bf16.msra.mxu0 %v139
  %186 = vmatprep.subr.bf16.mxu0 0
  %187 = vmatpush1.bf16.msra.mxu0 %v140
  %188 = vmatprep.subr.bf16.mxu0 0
  %189 = vmatpush1.bf16.msra.mxu0 %v141
  %190 = vmatprep.mubr.bf16.mxu0 %v59
  %191 = vmatmul.mubr.bf16.gmra.mrb[0].mxu0 %v58
  %v192 = vpop.f32.mrb[0].mxu0
  %v193 = vadd.f32 %v53, %v192
  %v194 = vpop.f32.mrb[0].mxu0
  %v195 = vpop.f32.mrb[0].mxu0
  %v196 = vpop.f32.mrb[0].mxu0
  %197 = vdwg.mxu0
  %v198 = vpack.c.bf16 %v193, %v193
  %199 = vst [vmem:[%s3] sm:$0xf] %v198
  // Predicated region
  $region14: #{patch_embed_forward.1} parent=0 // pred_check
    _
  $region15: #{patch_embed_forward.1} parent=0 // pred_check_branch
    %201 = sbr.rel (0) target = $region17
  $region16: #{patch_embed_forward.1} parent=0 // pred_region
    _
  $region17: #{patch_embed_forward.1} parent=0 // pred_fallthru
    _
  // Predicated region
  $region18: #{patch_embed_forward.1} parent=0 // pred_check
    _
  $region19: #{patch_embed_forward.1} parent=0 // pred_check_branch
    %203 = sbr.rel (0) target = $region21
  $region20: #{patch_embed_forward.1} parent=0 // pred_region
    _
  $region21: #{patch_embed_forward.1} parent=0 // pred_fallthru
    _

</llo_original>
